<compile_context>
chip_gen: v7x
topology: tpu7x:2x2x1
jax: 0.10.0
libtpu: 0.0.40
codegen_flags: <defaults>
</compile_context>

<pallas_src>
import functools

import numpy as np

import jax
import jax.numpy as jnp
from jax.experimental import pallas as pl
from jax.experimental.pallas import tpu as pltpu

AGGR_MEAN = 0
AGGR_MAX = 1


def _round_up(x, m):
    return (x + m - 1) // m * m


def _make_graph_pool_kernel(aggr, tile_n, tile_e):
    """Kernel args:
       (blk_start, blk_count, blk_seg_lo, blk_seg_hi,    # SMEM scalar prefetch
        sel_ref, seg_ref, scale_ref,                     # VMEM inputs
        out_ref, acc_ref)                                # output + f32 scratch
    """

    def kernel(bs_ref, ns_ref, lo_ref, hi_ref, sel_ref, seg_ref, scale_ref,
               out_ref, acc_ref):
        t = pl.program_id(0)        # node tile
        ei = pl.program_id(2)       # edge step within this node tile

        # ---- init accumulator on the first edge step of this (node, chan) tile
        @pl.when(ei == 0)
        def _():
            if aggr == AGGR_MAX:
                acc_ref[...] = jnp.full(acc_ref.shape, -jnp.inf, acc_ref.dtype)
            else:
                acc_ref[...] = jnp.zeros(acc_ref.shape, acc_ref.dtype)

        # ---- accumulate this edge block (skip steps past this tile's range)
        @pl.when(ei < ns_ref[t])
        def _():
            node_base = t * tile_n
            if aggr == AGGR_MEAN:
                # Segment-sum as a one-hot (node x edge) MXU matmul in x's dtype,
                # f32 accumulation.  Edges of other node tiles / padded edges have
                # out-of-range local ids -> all-zero one-hot columns.
                sel = sel_ref[...]                                  # (tile_e, tile_c)
                seg = seg_ref[...]                                  # (1, tile_e) i32
                rows = jax.lax.broadcasted_iota(jnp.int32, (tile_n, tile_e), 0)
                onehot = (rows == (seg - node_base)).astype(sel.dtype)
                acc_ref[...] += jnp.dot(onehot, sel,
                                        preferred_element_type=jnp.float32)
            else:
                # Vectorized masked segment-max.  seg is sorted, so the active
                # local-row range of this block comes from the prefetched per-block
                # [first, last] segment ids; loop only over those rows.
                sel = sel_ref[...].astype(jnp.float32)              # (tile_e, tile_c)
                seg = seg_ref[...]                                  # (tile_e, 1) i32
                b = bs_ref[t] + ei
                r_lo = jnp.maximum(lo_ref[b] - node_base, 0)
                r_hi = jnp.minimum(hi_ref[b] - node_base, tile_n - 1)

                def body(r, carry):
                    m = seg == (node_base + r)                      # (tile_e, 1)
                    masked = jnp.where(m, sel, -jnp.inf)            # (tile_e, tile_c)
                    rowmax = jnp.max(masked, axis=0, keepdims=True)  # (1, tile_c)
                    cur = acc_ref[pl.ds(r, 1), :]
                    acc_ref[pl.ds(r, 1), :] = jnp.maximum(cur, rowmax)
                    return carry

                jax.lax.fori_loop(r_lo, r_hi + 1, body, 0)

        # ---- finalize on the last edge step (lane-dense store of the out block)
        @pl.when(ei == pl.num_programs(2) - 1)
        def _():
            scale = scale_ref[...]                                  # (tile_n, 1) f32
            acc = acc_ref[...]
            if aggr == AGGR_MEAN:
                out = acc * scale                   # scale = 1/deg (0 if deg == 0)
            else:
                out = jnp.where(scale > 0, acc, 0.0)  # empty segments -> 0
            out_ref[...] = out.astype(out_ref.dtype)

    return kernel


@functools.partial(
    jax.jit, static_argnames=("aggr", "tile_e", "tile_n", "grid_et", "n_out"))
def _graph_pool_padded(x, idxn_pad, seg_op, scale, blk_start, blk_count,
                       blk_lo, blk_hi, *, aggr, tile_e, tile_n, grid_et, n_out):
    n_in, c = x.shape
    c_pad = _round_up(c, 128)
    tile_c = 256 if c_pad % 256 == 0 else 128
    e_pad = idxn_pad.shape[0]
    nb = e_pad // tile_e
    n_rows = scale.shape[0]
    grid_t = n_rows // tile_n
    grid_ct = c_pad // tile_c

    # Single-materialization gather: pad x's channels once, then one take()
    # produces the tile-aligned slab in x's native dtype.
    x_pad = jnp.pad(x, ((0, 0), (0, c_pad - c)))
    sel = jnp.take(x_pad, idxn_pad, axis=0)                          # (e_pad, c_pad)

    def _blk(ei, bs_ref, ns_ref, t):
        # Steps past this node tile's range revisit its last block (compute is
        # skipped there) and never index out of bounds.
        step = jnp.minimum(ei, jnp.maximum(ns_ref[t] - 1, 0))
        return jnp.minimum(bs_ref[t] + step, nb - 1)

    sel_spec = pl.BlockSpec(
        (tile_e, tile_c),
        lambda t, ci, ei, bs, ns, lo, hi: (_blk(ei, bs, ns, t), ci))
    if aggr == AGGR_MEAN:
        seg_spec = pl.BlockSpec(
            (1, tile_e),
            lambda t, ci, ei, bs, ns, lo, hi: (0, _blk(ei, bs, ns, t)))
    else:
        seg_spec = pl.BlockSpec(
            (tile_e, 1),
            lambda t, ci, ei, bs, ns, lo, hi: (_blk(ei, bs, ns, t), 0))
    scale_spec = pl.BlockSpec((tile_n, 1), lambda t, ci, ei, bs, ns, lo, hi: (t, 0))
    out_spec = pl.BlockSpec((tile_n, tile_c), lambda t, ci, ei, bs, ns, lo, hi: (t, ci))

    kernel = _make_graph_pool_kernel(aggr, tile_n, tile_e)

    itemsize = jnp.dtype(x.dtype).itemsize
    vmem_bytes = (2 * tile_e * tile_c * itemsize        # double-buffered slab tile
                  + 2 * tile_n * tile_c * itemsize      # output block
                  + tile_n * tile_c * 4                 # f32 accumulator
                  + 2 * tile_e * 128 * 4                # seg block (lane padded)
                  + 2 * tile_n * 128 * 4)               # scale block (lane padded)
    vmem_limit = int(min(96 * 1024 * 1024, max(16 * 1024 * 1024, 2 * vmem_bytes)))

    out_padded = pl.pallas_call(
        kernel,
        out_shape=jax.ShapeDtypeStruct((n_rows, c_pad), x.dtype),
        grid_spec=pltpu.PrefetchScalarGridSpec(
            num_scalar_prefetch=4,
            grid=(grid_t, grid_ct, grid_et),
            in_specs=[sel_spec, seg_spec, scale_spec],
            out_specs=out_spec,
            scratch_shapes=[pltpu.VMEM((tile_n, tile_c), jnp.float32)],
        ),
        compiler_params=pltpu.CompilerParams(
            dimension_semantics=("parallel", "parallel", "arbitrary"),
            vmem_limit_bytes=vmem_limit,
        ),
    )(blk_start, blk_count, blk_lo, blk_hi, sel, seg_op, scale)

    return out_padded[:n_out, :c]


def graph_pool_forward(x, idxn, degs, aggr, *, tile_e=256, tile_n=128):
    """x: (n_nodes_in, C) float, idxn: (E,) int indices into x,
       degs: (n_nodes_out,) int degrees (edges of output node i are contiguous)."""
    x = jnp.asarray(x)
    idxn_np = np.asarray(idxn).astype(np.int64)
    degs_np = np.asarray(degs).astype(np.int64)

    n_in, c = x.shape
    e = int(idxn_np.shape[0])
    n_out = int(degs_np.shape[0])
    if int(degs_np.sum()) != e:
        raise ValueError(f"sum(degs)={int(degs_np.sum())} != len(idxn)={e}")
    if n_out == 0:
        return jnp.zeros((0, c), x.dtype)
    if e == 0:
        return jnp.zeros((n_out, c), x.dtype)

    tile_n = _round_up(max(int(tile_n), 8), 8)
    tile_e = _round_up(max(int(tile_e), 128), 128)

    grid_t = -(-n_out // tile_n)
    n_rows = grid_t * tile_n
    e_pad = _round_up(e, tile_e)
    nb = e_pad // tile_e

    # Sorted per-edge segment ids; padded edges point past every real node row.
    seg_pad = np.full((e_pad,), n_rows, np.int32)
    seg_pad[:e] = np.repeat(np.arange(n_out, dtype=np.int32), degs_np)
    idxn_pad = np.zeros((e_pad,), np.int32)
    idxn_pad[:e] = idxn_np

    # Per-node-tile edge-block ranges (seg sorted => contiguous edge ranges).
    cum = np.zeros((n_out + 1,), np.int64)
    cum[1:] = np.cumsum(degs_np)
    blk_start = np.zeros((grid_t,), np.int32)
    blk_count = np.zeros((grid_t,), np.int32)
    for t in range(grid_t):
        lo_e = int(cum[min(t * tile_n, n_out)])
        hi_e = int(cum[min((t + 1) * tile_n, n_out)])
        b0 = min(lo_e // tile_e, nb - 1)
        blk_start[t] = b0
        blk_count[t] = 0 if hi_e <= lo_e else -(-hi_e // tile_e) - b0
    grid_et = max(1, int(blk_count.max()))

    # Per-edge-block first/last segment id over REAL edges (for the MAX row range).
    blk_idx = np.arange(nb, dtype=np.int64)
    blk_lo = seg_pad[blk_idx * tile_e].astype(np.int32)
    blk_hi = seg_pad[np.minimum((blk_idx + 1) * tile_e, e) - 1].astype(np.int32)

    # Per-node finalize factor: inv-degree for MEAN, deg>0 mask for MAX.
    col = np.zeros((n_rows,), np.float32)
    if aggr == AGGR_MEAN:
        col[:n_out] = np.where(degs_np > 0, 1.0 / np.maximum(degs_np, 1), 0.0)
    else:
        col[:n_out] = (degs_np > 0).astype(np.float32)

    if aggr == AGGR_MEAN:
        seg_op = jnp.asarray(seg_pad).reshape(1, e_pad)   # lane vector for one-hot
    else:
        seg_op = jnp.asarray(seg_pad).reshape(e_pad, 1)   # sublane column for masks

    return _graph_pool_padded(
        x, jnp.asarray(idxn_pad), seg_op, jnp.asarray(col).reshape(n_rows, 1),
        jnp.asarray(blk_start), jnp.asarray(blk_count),
        jnp.asarray(blk_lo), jnp.asarray(blk_hi),
        aggr=int(aggr), tile_e=tile_e, tile_n=tile_n, grid_et=grid_et, n_out=n_out)


class GraphPoolModule:
    """Functional equivalent of the PyTorch GraphPoolModule (forward only).

    gp_info is (idxn, degs).  edge_mem_limit sharding is subsumed by kernel tiling.
    """
    # TODO(synk): backward pass / argmax-index bookkeeping not implemented (forward only).

    def __init__(self, aggr, gp_info=None, edge_mem_limit=None):
        self._aggr = aggr
        self.set_info(gp_info)

    def set_info(self, gp_info):
        self._gpi = gp_info

    def __call__(self, x):
        idxn, degs = self._gpi
        return graph_pool_forward(x, idxn, degs, self._aggr)


def graph_pool_reference(x, idxn, degs, aggr):
    """Pure-JAX reference (segment mean / max over gathered rows)."""
    sel = x[idxn]
    n_out = degs.shape[0]
    seg = jnp.repeat(jnp.arange(n_out), degs, total_repeat_length=idxn.shape[0])
    if aggr == AGGR_MEAN:
        s = jax.ops.segment_sum(sel, seg, num_segments=n_out)
        return jnp.where(degs[:, None] > 0,
                         s / jnp.maximum(degs, 1)[:, None].astype(s.dtype), 0.0)
    m = jax.ops.segment_max(sel, seg, num_segments=n_out)
    return jnp.where(degs[:, None] > 0, m, 0.0)


if __name__ == "__main__":
    key = jax.random.PRNGKey(0)
    k1, k2 = jax.random.split(key)

    n_in, c = 24, 16                                         # input nodes x channels
    degs = jnp.array([4, 3, 0, 5, 2, 2], dtype=jnp.int32)    # 6 coarsened nodes
    e = int(degs.sum())                                      # 16 pooling edges
    x = jax.random.normal(k1, (n_in, c), jnp.float32)
    idxn = jax.random.randint(k2, (e,), 0, n_in, dtype=jnp.int32)

    pool_max = GraphPoolModule(AGGR_MAX, (idxn, degs))
    pool_mean = GraphPoolModule(AGGR_MEAN, (idxn, degs))

    out_max = jax.block_until_ready(pool_max(x))
    out_mean = jax.block_until_ready(pool_mean(x))

    ref_max = graph_pool_reference(x, idxn, degs, AGGR_MAX)
    ref_mean = graph_pool_reference(x, idxn, degs, AGGR_MEAN)

    assert out_max.shape == (degs.shape[0], c), out_max.shape
    assert out_mean.shape == (degs.shape[0], c), out_mean.shape
    assert jnp.allclose(out_max, ref_max, atol=1e-5), (out_max, ref_max)
    assert jnp.allclose(out_mean, ref_mean, atol=1e-5), (out_mean, ref_mean)

    print("KERNEL_OK")
</pallas_src>

<mosaic_0001>
module attributes {stable_mosaic.version = 11 : i64} {
  func.func @kernel(%arg0: i32, %arg1: i32, %arg2: i32, %arg3: memref<1xi32, #tpu.memory_space<smem>>, %arg4: memref<1xi32, #tpu.memory_space<smem>>, %arg5: memref<1xi32, #tpu.memory_space<smem>>, %arg6: memref<1xi32, #tpu.memory_space<smem>>, %arg7: memref<256x128xf32, #tpu.memory_space<vmem>>, %arg8: memref<256x1xi32, #tpu.memory_space<vmem>>, %arg9: memref<128x1xf32, #tpu.memory_space<vmem>>, %arg10: memref<128x128xf32, #tpu.memory_space<vmem>>, %arg11: memref<128x128xf32, #tpu.memory_space<vmem>>) attributes {dimension_semantics = [#tpu.dimension_semantics<parallel>, #tpu.dimension_semantics<parallel>, #tpu.dimension_semantics<arbitrary>], iteration_bounds = array<i64: 1, 1, 1>, scalar_prefetch = 4 : i64, scratch_operands = 1 : i64, tpu.core_type = #tpu.core_type<tc>, window_params = [{transform_indices = @transform_0, window_bounds = array<i64: 256, 128>}, {transform_indices = @transform_1, window_bounds = array<i64: 256, 1>}, {transform_indices = @transform_2, window_bounds = array<i64: 128, 1>}, {transform_indices = @transform_3, window_bounds = array<i64: 128, 128>}]} {
    %c0_i32 = arith.constant 0 : i32
    %0 = arith.cmpi eq, %arg2, %c0_i32 : i32
    %1 = arith.extui %0 : i1 to i32
    %c0_i32_0 = arith.constant 0 : i32
    %2 = arith.cmpi ne, %1, %c0_i32_0 : i32
    scf.if %2 {
      %cst = arith.constant 0xFF800000 : f32
      %11 = vector.broadcast %cst : f32 to vector<128x128xf32>
      %c0 = arith.constant 0 : index
      %c0_4 = arith.constant 0 : index
      %12 = vector.load %arg11[%c0, %c0_4] : memref<128x128xf32, #tpu.memory_space<vmem>>, vector<128x128xf32>
      tpu.vector_store %arg11[%c0, %c0_4], %11 {strides = array<i32>} : memref<128x128xf32, #tpu.memory_space<vmem>>, vector<128x128xf32>,
    } else {
    }
    %3 = arith.index_cast %arg0 : i32 to index
    %4 = memref.load %arg4[%3] : memref<1xi32, #tpu.memory_space<smem>>
    %5 = arith.cmpi slt, %arg2, %4 : i32
    %6 = arith.extui %5 : i1 to i32
    %c0_i32_1 = arith.constant 0 : i32
    %7 = arith.cmpi ne, %6, %c0_i32_1 : i32
    scf.if %7 {
      %c128_i32 = arith.constant 128 : i32
      %11 = arith.muli %arg0, %c128_i32 : i32
      %c0 = arith.constant 0 : index
      %c0_4 = arith.constant 0 : index
      %12 = vector.load %arg7[%c0, %c0_4] : memref<256x128xf32, #tpu.memory_space<vmem>>, vector<256x128xf32>
      %c0_5 = arith.constant 0 : index
      %c0_6 = arith.constant 0 : index
      %13 = vector.load %arg8[%c0_5, %c0_6] : memref<256x1xi32, #tpu.memory_space<vmem>>, vector<256x1xi32>
      %14 = arith.index_cast %arg0 : i32 to index
      %15 = memref.load %arg3[%14] : memref<1xi32, #tpu.memory_space<smem>>
      %16 = arith.addi %15, %arg2 : i32
      %17 = arith.index_cast %16 : i32 to index
      %18 = memref.load %arg5[%17] : memref<1xi32, #tpu.memory_space<smem>>
      %19 = arith.subi %18, %11 : i32
      %c0_i32_7 = arith.constant 0 : i32
      %20 = arith.maxsi %19, %c0_i32_7 : i32
      %21 = arith.index_cast %16 : i32 to index
      %22 = memref.load %arg6[%21] : memref<1xi32, #tpu.memory_space<smem>>
      %23 = arith.subi %22, %11 : i32
      %c127_i32 = arith.constant 127 : i32
      %24 = arith.minsi %23, %c127_i32 : i32
      %c1_i32 = arith.constant 1 : i32
      %25 = arith.addi %24, %c1_i32 : i32
      %c0_i32_8 = arith.constant 0 : i32
      %26 = arith.subi %25, %20 : i32
      %27 = arith.addi %20, %26 : i32
      %c1_i32_9 = arith.constant 1 : i32
      scf.for %arg12 = %20 to %27 step %c1_i32_9  : i32 {
        %28 = arith.addi %11, %arg12 : i32
        %29 = vector.broadcast %28 : i32 to vector<256x1xi32>
        %30 = arith.cmpi eq, %13, %29 : vector<256x1xi32>
        %cst = arith.constant 0xFF800000 : f32
        %31 = vector.shape_cast %30 : vector<256x1xi1> to vector<256x1xi1>
        %32 = vector.broadcast %31 : vector<256x1xi1> to vector<256x128xi1>
        %33 = vector.broadcast %cst : f32 to vector<256x128xf32>
        %34 = arith.select %32, %12, %33 : vector<256x128xi1>, vector<256x128xf32>
        %cst_10 = arith.constant dense<0xFF800000> : vector<128xf32>
        %35 = vector.multi_reduction <maximumf>, %34, %cst_10 [0] : vector<256x128xf32> to vector<128xf32>
        %36 = vector.shape_cast %35 : vector<128xf32> to vector<1x128xf32>
        %37 = arith.index_cast %arg12 : i32 to index
        %c0_11 = arith.constant 0 : index
        %38 = vector.load %arg11[%37, %c0_11] : memref<128x128xf32, #tpu.memory_space<vmem>>, vector<1x128xf32>
        %39 = arith.maximumf %38, %36 : vector<1x128xf32>
        %40 = arith.index_cast %arg12 : i32 to index
        %c0_12 = arith.constant 0 : index
        %41 = vector.load %arg11[%40, %c0_12] : memref<128x128xf32, #tpu.memory_space<vmem>>, vector<1x128xf32>
        tpu.vector_store %arg11[%40, %c0_12], %39 {strides = array<i32>} : memref<128x128xf32, #tpu.memory_space<vmem>>, vector<1x128xf32>,
      }
    } else {
    }
    %c0_i32_2 = arith.constant 0 : i32
    %8 = arith.cmpi eq, %arg2, %c0_i32_2 : i32
    %9 = arith.extui %8 : i1 to i32
    %c0_i32_3 = arith.constant 0 : i32
    %10 = arith.cmpi ne, %9, %c0_i32_3 : i32
    scf.if %10 {
      %c0 = arith.constant 0 : index
      %c0_4 = arith.constant 0 : index
      %11 = vector.load %arg9[%c0, %c0_4] : memref<128x1xf32, #tpu.memory_space<vmem>>, vector<128x1xf32>
      %c0_5 = arith.constant 0 : index
      %c0_6 = arith.constant 0 : index
      %12 = vector.load %arg11[%c0_5, %c0_6] : memref<128x128xf32, #tpu.memory_space<vmem>>, vector<128x128xf32>
      %cst = arith.constant 0.000000e+00 : f32
      %13 = vector.broadcast %cst : f32 to vector<128x1xf32>
      %14 = arith.cmpf ogt, %11, %13 : vector<128x1xf32>
      %cst_7 = arith.constant 0.000000e+00 : f32
      %15 = vector.shape_cast %14 : vector<128x1xi1> to vector<128x1xi1>
      %16 = vector.broadcast %15 : vector<128x1xi1> to vector<128x128xi1>
      %17 = vector.broadcast %cst_7 : f32 to vector<128x128xf32>
      %18 = arith.select %16, %12, %17 : vector<128x128xi1>, vector<128x128xf32>
      %c0_8 = arith.constant 0 : index
      %c0_9 = arith.constant 0 : index
      %19 = vector.load %arg10[%c0_8, %c0_9] : memref<128x128xf32, #tpu.memory_space<vmem>>, vector<128x128xf32>
      tpu.vector_store %arg10[%c0_8, %c0_9], %18 {strides = array<i32>} : memref<128x128xf32, #tpu.memory_space<vmem>>, vector<128x128xf32>,
    } else {
    }
    return
  }
  func.func @transform_0(%arg0: i32, %arg1: i32, %arg2: i32, %arg3: memref<1xi32, #tpu.memory_space<smem>>, %arg4: memref<1xi32, #tpu.memory_space<smem>>, %arg5: memref<1xi32, #tpu.memory_space<smem>>, %arg6: memref<1xi32, #tpu.memory_space<smem>>) -> (i32, i32) {
    %0 = arith.index_cast %arg0 : i32 to index
    %1 = memref.load %arg4[%0] : memref<1xi32, #tpu.memory_space<smem>>
    %c1_i32 = arith.constant 1 : i32
    %2 = arith.subi %1, %c1_i32 : i32
    %c0_i32 = arith.constant 0 : i32
    %3 = arith.maxsi %2, %c0_i32 : i32
    %4 = arith.minsi %arg2, %3 : i32
    %5 = arith.index_cast %arg0 : i32 to index
    %6 = memref.load %arg3[%5] : memref<1xi32, #tpu.memory_space<smem>>
    %7 = arith.addi %6, %4 : i32
    %c0_i32_0 = arith.constant 0 : i32
    %8 = arith.minsi %7, %c0_i32_0 : i32
    %c0_i32_1 = arith.constant 0 : i32
    return %8, %arg1 : i32, i32
  }
  func.func @transform_1(%arg0: i32, %arg1: i32, %arg2: i32, %arg3: memref<1xi32, #tpu.memory_space<smem>>, %arg4: memref<1xi32, #tpu.memory_space<smem>>, %arg5: memref<1xi32, #tpu.memory_space<smem>>, %arg6: memref<1xi32, #tpu.memory_space<smem>>) -> (i32, i32) {
    %0 = arith.index_cast %arg0 : i32 to index
    %1 = memref.load %arg4[%0] : memref<1xi32, #tpu.memory_space<smem>>
    %c1_i32 = arith.constant 1 : i32
    %2 = arith.subi %1, %c1_i32 : i32
    %c0_i32 = arith.constant 0 : i32
    %3 = arith.maxsi %2, %c0_i32 : i32
    %4 = arith.minsi %arg2, %3 : i32
    %5 = arith.index_cast %arg0 : i32 to index
    %6 = memref.load %arg3[%5] : memref<1xi32, #tpu.memory_space<smem>>
    %7 = arith.addi %6, %4 : i32
    %c0_i32_0 = arith.constant 0 : i32
    %8 = arith.minsi %7, %c0_i32_0 : i32
    %c0_i32_1 = arith.constant 0 : i32
    %c0_i32_2 = arith.constant 0 : i32
    return %8, %c0_i32_1 : i32, i32
  }
  func.func @transform_2(%arg0: i32, %arg1: i32, %arg2: i32, %arg3: memref<1xi32, #tpu.memory_space<smem>>, %arg4: memref<1xi32, #tpu.memory_space<smem>>, %arg5: memref<1xi32, #tpu.memory_space<smem>>, %arg6: memref<1xi32, #tpu.memory_space<smem>>) -> (i32, i32) {
    %c0_i32 = arith.constant 0 : i32
    %c0_i32_0 = arith.constant 0 : i32
    return %arg0, %c0_i32 : i32, i32
  }
  func.func @transform_3(%arg0: i32, %arg1: i32, %arg2: i32, %arg3: memref<1xi32, #tpu.memory_space<smem>>, %arg4: memref<1xi32, #tpu.memory_space<smem>>, %arg5: memref<1xi32, #tpu.memory_space<smem>>, %arg6: memref<1xi32, #tpu.memory_space<smem>>) -> (i32, i32) {
    %c0_i32 = arith.constant 0 : i32
    return %arg0, %arg1 : i32, i32
  }
}

</mosaic_0001>

<llo_original>
// kernel: _graph_pool_padded.1
$region0: #{_graph_pool_padded.1}
  #allocation0 [shape = 'u32[]', space=smem, size = 0x4, offset = 0x4, fixed_abs, tag = 'smem constant byte address 0x4 - core index']
  #allocation1 [shape = 'u32[144,128]{1,0:T(1,128)}', space=vmem, size = 0x12000, scoped, tag = 'internal scratch']
  #allocation2 [shape = 'f32[128,128]{1,0:T(8,128)}', space=vmem, size = 0x10000, scoped, tag = 'scratch operand']
  #allocation3 [shape = 's32[1]{0}', space=sflag, size = 0x4, scoped, tag = 'scoped memory for _graph_pool_padded.1']
  #allocation4 [shape = 's32[1]{0:T(128)S(6)}', space=smem, size = 0x200, scoped, tag = 'prefetched SMEM operand 0']
  #allocation5 [shape = 's32[1]{0:T(128)S(6)}', space=smem, size = 0x200, scoped, tag = 'prefetched SMEM operand 1']
  #allocation6 [shape = 's32[1]{0:T(128)S(6)}', space=smem, size = 0x200, scoped, tag = 'prefetched SMEM operand 2']
  #allocation7 [shape = 's32[1]{0:T(128)S(6)}', space=smem, size = 0x200, scoped, tag = 'prefetched SMEM operand 3']
  %s0 = inlined_call_operand.<no memory space> [shape: s32[1], index: 0, kind: input, shape index: {}]
  %s1 = inlined_call_operand.<no memory space> [shape: s32[1], index: 1, kind: input, shape index: {}]
  %s2 = inlined_call_operand.<no memory space> [shape: s32[1], index: 2, kind: input, shape index: {}]
  %s3 = inlined_call_operand.<no memory space> [shape: s32[1], index: 3, kind: input, shape index: {}]
  %s4 = inlined_call_operand.vmem [shape: f32[256,128], index: 4, kind: input, shape index: {}]
  %s5 = inlined_call_operand.vmem [shape: s32[256,1], index: 5, kind: input, shape index: {}]
  %s6 = inlined_call_operand.vmem [shape: f32[128,1], index: 6, kind: input, shape index: {}]
  %s7 = inlined_call_operand.vmem [shape: f32[128,128], index: 7, kind: output, shape index: {}]
  %s8 = sld [smem:[#allocation0]]
  $region41: #{_graph_pool_padded.1} parent=0
    _
  %s10 = ssub.s32 1, %s8
  %s11 = scalar_select 0, %s10, %s8
  %12 = sst [smem:[#allocation4]] %s0
  %13 = sst [smem:[#allocation5]] %s1
  %14 = sst [smem:[#allocation6]] %s2
  %15 = sst [smem:[#allocation7]] %s3
  // Predicated region
  $region2: #{_graph_pool_padded.1} parent=0 // pred_check
    _
  $region3: #{_graph_pool_padded.1} parent=0 // pred_check_branch
    %17 = sbr.rel (0) target = $region5
  $region4: #{_graph_pool_padded.1} parent=0 // pred_region
    %s18 = sld [smem:[#allocation5]]
    %s19 = ssub.s32 %s18, 1
    %p20 = scmp.gt.s32.totalorder %s19, 0
    %s21 = scalar_select %p20, %s19, 0
    %p22 = scmp.lt.s32.totalorder 0, %s21
    %s23 = scalar_select %p22, 0, %s21
    %s24 = sld [smem:[#allocation4]]
    %s25 = sadd.s32 %s24, %s23
    %p26 = scmp.lt.s32.totalorder %s25, 0
    %s27 = scalar_select %p26, %s25, 0
    %s28 = smul.u32 32, %s27
    %p29 = scmp.lt.s32.totalorder %s28, 31
    %s30 = scalar_select %p29, %s28, 31
    %s31 = smul.addr %s30, 8
    %s32 = scalar_lea.vmem %s4, %s31
    %s33 = sld [smem:[#allocation5]]
    %s34 = ssub.s32 %s33, 1
    %p35 = scmp.gt.s32.totalorder %s34, 0
    %s36 = scalar_select %p35, %s34, 0
    %p37 = scmp.lt.s32.totalorder 0, %s36
    %s38 = scalar_select %p37, 0, %s36
    %s39 = sld [smem:[#allocation4]]
    %s40 = sadd.s32 %s39, %s38
    %p41 = scmp.lt.s32.totalorder %s40, 0
    %s42 = scalar_select %p41, %s40, 0
    %s43 = smul.u32 32, %s42
  $region5: #{_graph_pool_padded.1} parent=0 // pred_fallthru
    _
  // Predicated region
  $region6: #{_graph_pool_padded.1} parent=0 // pred_check
    _
  $region7: #{_graph_pool_padded.1} parent=0 // pred_check_branch
    %45 = sbr.rel (0) target = $region9
  $region8: #{_graph_pool_padded.1} parent=0 // pred_region
    %s46 = sld [smem:[#allocation5]]
    %s47 = ssub.s32 %s46, 1
    %p48 = scmp.gt.s32.totalorder %s47, 0
    %s49 = scalar_select %p48, %s47, 0
    %p50 = scmp.lt.s32.totalorder 0, %s49
    %s51 = scalar_select %p50, 0, %s49
    %s52 = sld [smem:[#allocation4]]
    %s53 = sadd.s32 %s52, %s51
    %p54 = scmp.lt.s32.totalorder %s53, 0
    %s55 = scalar_select %p54, %s53, 0
    %s56 = smul.u32 32, %s55
    %p57 = scmp.lt.s32.totalorder %s56, 31
    %s58 = scalar_select %p57, %s56, 31
    %s59 = smul.addr %s58, 8
    %s60 = scalar_lea.vmem %s5, %s59
    %s61 = sld [smem:[#allocation5]]
    %s62 = ssub.s32 %s61, 1
    %p63 = scmp.gt.s32.totalorder %s62, 0
    %s64 = scalar_select %p63, %s62, 0
    %p65 = scmp.lt.s32.totalorder 0, %s64
    %s66 = scalar_select %p65, 0, %s64
    %s67 = sld [smem:[#allocation4]]
    %s68 = sadd.s32 %s67, %s66
    %p69 = scmp.lt.s32.totalorder %s68, 0
    %s70 = scalar_select %p69, %s68, 0
    %s71 = smul.u32 32, %s70
  $region9: #{_graph_pool_padded.1} parent=0 // pred_fallthru
    _
  // Predicated region
  $region10: #{_graph_pool_padded.1} parent=0 // pred_check
    _
  $region11: #{_graph_pool_padded.1} parent=0 // pred_check_branch
    %73 = sbr.rel (0) target = $region13
  $region12: #{_graph_pool_padded.1} parent=0 // pred_region
    _
  $region13: #{_graph_pool_padded.1} parent=0 // pred_fallthru
    _
  %s74 = sld [smem:[#allocation5]]
  %s75 = ssub.s32 %s74, 1
  %p76 = scmp.gt.s32.totalorder %s75, 0
  %s77 = scalar_select %p76, %s75, 0
  %p78 = scmp.lt.s32.totalorder 0, %s77
  %s79 = scalar_select %p78, 0, %s77
  %s80 = sld [smem:[#allocation4]]
  %s81 = sadd.s32 %s80, %s79
  %p82 = scmp.lt.s32.totalorder %s81, 0
  %s83 = scalar_select %p82, %s81, 0
  %s84 = smul.u32 32, %s83
  %p85 = scmp.lt.s32.totalorder %s84, 31
  %s86 = scalar_select %p85, %s84, 31
  %s87 = smul.addr %s86, 8
  %s88 = scalar_lea.vmem %s4, %s87
  %s89 = sld [smem:[#allocation5]]
  %s90 = ssub.s32 %s89, 1
  %p91 = scmp.gt.s32.totalorder %s90, 0
  %s92 = scalar_select %p91, %s90, 0
  %p93 = scmp.lt.s32.totalorder 0, %s92
  %s94 = scalar_select %p93, 0, %s92
  %s95 = sld [smem:[#allocation4]]
  %s96 = sadd.s32 %s95, %s94
  %p97 = scmp.lt.s32.totalorder %s96, 0
  %s98 = scalar_select %p97, %s96, 0
  %s99 = smul.u32 32, %s98
  %p100 = scmp.lt.s32.totalorder %s99, 31
  %s101 = scalar_select %p100, %s99, 31
  %s102 = smul.addr %s101, 8
  %s103 = scalar_lea.vmem %s5, %s102
  %s104 = sld [smem:[#allocation5]]
  %s105 = ssub.s32 %s104, 1
  %p106 = scmp.gt.s32.totalorder %s105, 0
  %s107 = scalar_select %p106, %s105, 0
  %p108 = scmp.lt.s32.totalorder 0, %s107
  %s109 = scalar_select %p108, 0, %s107
  %s110 = sld [smem:[#allocation4]]
  %s111 = sadd.s32 %s110, %s109
  %p112 = scmp.lt.s32.totalorder %s111, 0
  %s113 = scalar_select %p112, %s111, 0
  %s114 = smul.u32 32, %s113
  %p115 = scmp.lt.s32.totalorder %s114, 31
  %s116 = scalar_select %p115, %s114, 31
  %s117 = smul.addr %s116, 8
  %s118 = scalar_lea.vmem %s4, %s117
  %s119 = sld [smem:[#allocation5]]
  %s120 = ssub.s32 %s119, 1
  %p121 = scmp.gt.s32.totalorder %s120, 0
  %s122 = scalar_select %p121, %s120, 0
  %p123 = scmp.lt.s32.totalorder 0, %s122
  %s124 = scalar_select %p123, 0, %s122
  %s125 = sld [smem:[#allocation4]]
  %s126 = sadd.s32 %s125, %s124
  %p127 = scmp.lt.s32.totalorder %s126, 0
  %s128 = scalar_select %p127, %s126, 0
  %s129 = smul.u32 32, %s128
  %s130 = sld [smem:[#allocation5]]
  %s131 = ssub.s32 %s130, 1
  %p132 = scmp.gt.s32.totalorder %s131, 0
  %s133 = scalar_select %p132, %s131, 0
  %p134 = scmp.lt.s32.totalorder 0, %s133
  %s135 = scalar_select %p134, 0, %s133
  %s136 = sld [smem:[#allocation4]]
  %s137 = sadd.s32 %s136, %s135
  %p138 = scmp.lt.s32.totalorder %s137, 0
  %s139 = scalar_select %p138, %s137, 0
  %s140 = smul.u32 32, %s139
  %p141 = scmp.lt.s32.totalorder %s140, 31
  %s142 = scalar_select %p141, %s140, 31
  %s143 = smul.addr %s142, 8
  %s144 = scalar_lea.vmem %s5, %s143
  %s145 = sld [smem:[#allocation5]]
  %s146 = ssub.s32 %s145, 1
  %p147 = scmp.gt.s32.totalorder %s146, 0
  %s148 = scalar_select %p147, %s146, 0
  %p149 = scmp.lt.s32.totalorder 0, %s148
  %s150 = scalar_select %p149, 0, %s148
  %s151 = sld [smem:[#allocation4]]
  %s152 = sadd.s32 %s151, %s150
  %p153 = scmp.lt.s32.totalorder %s152, 0
  %s154 = scalar_select %p153, %s152, 0
  %s155 = smul.u32 32, %s154
  %p156 = scmp.eq.s32.totalorder 0, 0
  // Predicated region
  $region14: #{_graph_pool_padded.1} parent=0 // pred_check
    %p157 = pneg %p156
  $region15: #{_graph_pool_padded.1} parent=0 // pred_check_branch
    %159 = sbr.rel (%p157) target = $region17
  $region16: #{_graph_pool_padded.1} parent=0 // pred_region
    %160 = vst [vmem:[#allocation2] sm:$0xff] -inf
    %161 = vst [vmem:[#allocation2 + $0x8] sm:$0xff] -inf
    %162 = vst [vmem:[#allocation2 + $0x10] sm:$0xff] -inf
    %163 = vst [vmem:[#allocation2 + $0x18] sm:$0xff] -inf
    %164 = vst [vmem:[#allocation2 + $0x20] sm:$0xff] -inf
    %165 = vst [vmem:[#allocation2 + $0x28] sm:$0xff] -inf
    %166 = vst [vmem:[#allocation2 + $0x30] sm:$0xff] -inf
    %167 = vst [vmem:[#allocation2 + $0x38] sm:$0xff] -inf
    %168 = vst [vmem:[#allocation2 + $0x40] sm:$0xff] -inf
    %169 = vst [vmem:[#allocation2 + $0x48] sm:$0xff] -inf
    %170 = vst [vmem:[#allocation2 + $0x50] sm:$0xff] -inf
    %171 = vst [vmem:[#allocation2 + $0x58] sm:$0xff] -inf
    %172 = vst [vmem:[#allocation2 + $0x60] sm:$0xff] -inf
    %173 = vst [vmem:[#allocation2 + $0x68] sm:$0xff] -inf
    %174 = vst [vmem:[#allocation2 + $0x70] sm:$0xff] -inf
    %175 = vst [vmem:[#allocation2 + $0x78] sm:$0xff] -inf
  $region17: #{_graph_pool_padded.1} parent=0 // pred_fallthru
    _
  %s176 = sld [smem:[#allocation5]]
  %p177 = scmp.lt.s32.totalorder 0, %s176
  // Predicated region
  $region18: #{_graph_pool_padded.1} parent=0 // pred_check
    %p178 = pneg %p177
  $region19: #{_graph_pool_padded.1} parent=0 // pred_check_branch
    %180 = sbr.rel (%p178) target = $region21
  $region20: #{_graph_pool_padded.1} parent=0 // pred_region
    %s181 = smul.u32 0, 128
    %v182 = vld [vmem:[%s118] sm:$0xff]
    %v183 = vld [vmem:[%s118 + $0x8] sm:$0xff]
    %v184 = vld [vmem:[%s118 + $0x10] sm:$0xff]
    %v185 = vld [vmem:[%s118 + $0x18] sm:$0xff]
    %v186 = vld [vmem:[%s118 + $0x20] sm:$0xff]
    %v187 = vld [vmem:[%s118 + $0x28] sm:$0xff]
    %v188 = vld [vmem:[%s118 + $0x30] sm:$0xff]
    %v189 = vld [vmem:[%s118 + $0x38] sm:$0xff]
    %v190 = vld [vmem:[%s118 + $0x40] sm:$0xff]
    %v191 = vld [vmem:[%s118 + $0x48] sm:$0xff]
    %v192 = vld [vmem:[%s118 + $0x50] sm:$0xff]
    %v193 = vld [vmem:[%s118 + $0x58] sm:$0xff]
    %v194 = vld [vmem:[%s118 + $0x60] sm:$0xff]
    %v195 = vld [vmem:[%s118 + $0x68] sm:$0xff]
    %v196 = vld [vmem:[%s118 + $0x70] sm:$0xff]
    %v197 = vld [vmem:[%s118 + $0x78] sm:$0xff]
    %v198 = vld [vmem:[%s118 + $0x80] sm:$0xff]
    %v199 = vld [vmem:[%s118 + $0x88] sm:$0xff]
    %v200 = vld [vmem:[%s118 + $0x90] sm:$0xff]
    %v201 = vld [vmem:[%s118 + $0x98] sm:$0xff]
    %v202 = vld [vmem:[%s118 + $0xa0] sm:$0xff]
    %v203 = vld [vmem:[%s118 + $0xa8] sm:$0xff]
    %v204 = vld [vmem:[%s118 + $0xb0] sm:$0xff]
    %v205 = vld [vmem:[%s118 + $0xb8] sm:$0xff]
    %v206 = vld [vmem:[%s118 + $0xc0] sm:$0xff]
    %v207 = vld [vmem:[%s118 + $0xc8] sm:$0xff]
    %v208 = vld [vmem:[%s118 + $0xd0] sm:$0xff]
    %v209 = vld [vmem:[%s118 + $0xd8] sm:$0xff]
    %v210 = vld [vmem:[%s118 + $0xe0] sm:$0xff]
    %v211 = vld [vmem:[%s118 + $0xe8] sm:$0xff]
    %v212 = vld [vmem:[%s118 + $0xf0] sm:$0xff]
    %v213 = vld [vmem:[%s118 + $0xf8] sm:$0xff]
    %v214 = vld [vmem:[%s144] sm:$0xff]
    %v215 = vld [vmem:[%s144 + $0x8] sm:$0xff]
    %v216 = vld [vmem:[%s144 + $0x10] sm:$0xff]
    %v217 = vld [vmem:[%s144 + $0x18] sm:$0xff]
    %v218 = vld [vmem:[%s144 + $0x20] sm:$0xff]
    %v219 = vld [vmem:[%s144 + $0x28] sm:$0xff]
    %v220 = vld [vmem:[%s144 + $0x30] sm:$0xff]
    %v221 = vld [vmem:[%s144 + $0x38] sm:$0xff]
    %v222 = vld [vmem:[%s144 + $0x40] sm:$0xff]
    %v223 = vld [vmem:[%s144 + $0x48] sm:$0xff]
    %v224 = vld [vmem:[%s144 + $0x50] sm:$0xff]
    %v225 = vld [vmem:[%s144 + $0x58] sm:$0xff]
    %v226 = vld [vmem:[%s144 + $0x60] sm:$0xff]
    %v227 = vld [vmem:[%s144 + $0x68] sm:$0xff]
    %v228 = vld [vmem:[%s144 + $0x70] sm:$0xff]
    %v229 = vld [vmem:[%s144 + $0x78] sm:$0xff]
    %v230 = vld [vmem:[%s144 + $0x80] sm:$0xff]
    %v231 = vld [vmem:[%s144 + $0x88] sm:$0xff]
    %v232 = vld [vmem:[%s144 + $0x90] sm:$0xff]
    %v233 = vld [vmem:[%s144 + $0x98] sm:$0xff]
    %v234 = vld [vmem:[%s144 + $0xa0] sm:$0xff]
    %v235 = vld [vmem:[%s144 + $0xa8] sm:$0xff]
    %v236 = vld [vmem:[%s144 + $0xb0] sm:$0xff]
    %v237 = vld [vmem:[%s144 + $0xb8] sm:$0xff]
    %v238 = vld [vmem:[%s144 + $0xc0] sm:$0xff]
    %v239 = vld [vmem:[%s144 + $0xc8] sm:$0xff]
    %v240 = vld [vmem:[%s144 + $0xd0] sm:$0xff]
    %v241 = vld [vmem:[%s144 + $0xd8] sm:$0xff]
    %v242 = vld [vmem:[%s144 + $0xe0] sm:$0xff]
    %v243 = vld [vmem:[%s144 + $0xe8] sm:$0xff]
    %v244 = vld [vmem:[%s144 + $0xf0] sm:$0xff]
    %v245 = vld [vmem:[%s144 + $0xf8] sm:$0xff]
    %s246 = sld [smem:[#allocation4]]
    %s247 = sadd.s32 %s246, 0
    %s248 = sld [smem:[#allocation6 + %s247]]
    %s249 = ssub.s32 %s248, %s181
    %p250 = scmp.gt.s32.totalorder %s249, 0
    %s251 = scalar_select %p250, %s249, 0
    %s252 = sld [smem:[#allocation7 + %s247]]
    %s253 = ssub.s32 %s252, %s181
    %p254 = scmp.lt.s32.totalorder %s253, 127
    %s255 = scalar_select %p254, %s253, 127
    %s256 = sadd.s32 %s255, 1
    // While loop
    $region22: #{_graph_pool_padded.1} parent=20 // loop_pre_header
      _
    $region23: #{_graph_pool_padded.1} parent=20 // loop_header
      %s258 = sphi %s251, %s260
      %p259 = scmp.ge.s32.totalorder %s258, %s256
    $region24: #{_graph_pool_padded.1} parent=20 // loop_header_branch
      %262 = sbr.rel (%p259) target = $region28
    $region25: #{_graph_pool_padded.1} parent=20 // loop_body
      %s263 = sadd.s32 %s181, %s258
      %v264 = vstv %s263
      %vm265 = vcmp.eq.s32.totalorder %v214, %v264
      %vm266 = vcmp.eq.s32.totalorder %v215, %v264
      %vm267 = vcmp.eq.s32.totalorder %v216, %v264
      %vm268 = vcmp.eq.s32.totalorder %v217, %v264
      %vm269 = vcmp.eq.s32.totalorder %v218, %v264
      %vm270 = vcmp.eq.s32.totalorder %v219, %v264
      %vm271 = vcmp.eq.s32.totalorder %v220, %v264
      %vm272 = vcmp.eq.s32.totalorder %v221, %v264
      %vm273 = vcmp.eq.s32.totalorder %v222, %v264
      %vm274 = vcmp.eq.s32.totalorder %v223, %v264
      %vm275 = vcmp.eq.s32.totalorder %v224, %v264
      %vm276 = vcmp.eq.s32.totalorder %v225, %v264
      %vm277 = vcmp.eq.s32.totalorder %v226, %v264
      %vm278 = vcmp.eq.s32.totalorder %v227, %v264
      %vm279 = vcmp.eq.s32.totalorder %v228, %v264
      %vm280 = vcmp.eq.s32.totalorder %v229, %v264
      %vm281 = vcmp.eq.s32.totalorder %v230, %v264
      %vm282 = vcmp.eq.s32.totalorder %v231, %v264
      %vm283 = vcmp.eq.s32.totalorder %v232, %v264
      %vm284 = vcmp.eq.s32.totalorder %v233, %v264
      %vm285 = vcmp.eq.s32.totalorder %v234, %v264
      %vm286 = vcmp.eq.s32.totalorder %v235, %v264
      %vm287 = vcmp.eq.s32.totalorder %v236, %v264
      %vm288 = vcmp.eq.s32.totalorder %v237, %v264
      %vm289 = vcmp.eq.s32.totalorder %v238, %v264
      %vm290 = vcmp.eq.s32.totalorder %v239, %v264
      %vm291 = vcmp.eq.s32.totalorder %v240, %v264
      %vm292 = vcmp.eq.s32.totalorder %v241, %v264
      %vm293 = vcmp.eq.s32.totalorder %v242, %v264
      %vm294 = vcmp.eq.s32.totalorder %v243, %v264
      %vm295 = vcmp.eq.s32.totalorder %v244, %v264
      %vm296 = vcmp.eq.s32.totalorder %v245, %v264
      %v297 = vsel %vm265, 1, 0
      %v298 = vsel %vm266, 1, 0
      %v299 = vsel %vm267, 1, 0
      %v300 = vsel %vm268, 1, 0
      %v301 = vsel %vm269, 1, 0
      %v302 = vsel %vm270, 1, 0
      %v303 = vsel %vm271, 1, 0
      %v304 = vsel %vm272, 1, 0
      %v305 = vsel %vm273, 1, 0
      %v306 = vsel %vm274, 1, 0
      %v307 = vsel %vm275, 1, 0
      %v308 = vsel %vm276, 1, 0
      %v309 = vsel %vm277, 1, 0
      %v310 = vsel %vm278, 1, 0
      %v311 = vsel %vm279, 1, 0
      %v312 = vsel %vm280, 1, 0
      %v313 = vsel %vm281, 1, 0
      %v314 = vsel %vm282, 1, 0
      %v315 = vsel %vm283, 1, 0
      %v316 = vsel %vm284, 1, 0
      %v317 = vsel %vm285, 1, 0
      %v318 = vsel %vm286, 1, 0
      %v319 = vsel %vm287, 1, 0
      %v320 = vsel %vm288, 1, 0
      %v321 = vsel %vm289, 1, 0
      %v322 = vsel %vm290, 1, 0
      %v323 = vsel %vm291, 1, 0
      %v324 = vsel %vm292, 1, 0
      %v325 = vsel %vm293, 1, 0
      %v326 = vsel %vm294, 1, 0
      %v327 = vsel %vm295, 1, 0
      %v328 = vsel %vm296, 1, 0
      %329 = vset.pattern.permute.xlu0 0
      %330 = vperm.xlu0 %329, %v297
      %v331 = vpop.permute.xlu0 %330
      %332 = vset.pattern.permute.xlu0 0
      %333 = vperm.xlu0 %332, %v298
      %v334 = vpop.permute.xlu0 %333
      %335 = vset.pattern.permute.xlu0 0
      %336 = vperm.xlu0 %335, %v299
      %v337 = vpop.permute.xlu0 %336
      %338 = vset.pattern.permute.xlu0 0
      %339 = vperm.xlu0 %338, %v300
      %v340 = vpop.permute.xlu0 %339
      %341 = vset.pattern.permute.xlu0 0
      %342 = vperm.xlu0 %341, %v301
      %v343 = vpop.permute.xlu0 %342
      %344 = vset.pattern.permute.xlu0 0
      %345 = vperm.xlu0 %344, %v302
      %v346 = vpop.permute.xlu0 %345
      %347 = vset.pattern.permute.xlu0 0
      %348 = vperm.xlu0 %347, %v303
      %v349 = vpop.permute.xlu0 %348
      %350 = vset.pattern.permute.xlu0 0
      %351 = vperm.xlu0 %350, %v304
      %v352 = vpop.permute.xlu0 %351
      %353 = vset.pattern.permute.xlu0 0
      %354 = vperm.xlu0 %353, %v305
      %v355 = vpop.permute.xlu0 %354
      %356 = vset.pattern.permute.xlu0 0
      %357 = vperm.xlu0 %356, %v306
      %v358 = vpop.permute.xlu0 %357
      %359 = vset.pattern.permute.xlu0 0
      %360 = vperm.xlu0 %359, %v307
      %v361 = vpop.permute.xlu0 %360
      %362 = vset.pattern.permute.xlu0 0
      %363 = vperm.xlu0 %362, %v308
      %v364 = vpop.permute.xlu0 %363
      %365 = vset.pattern.permute.xlu0 0
      %366 = vperm.xlu0 %365, %v309
      %v367 = vpop.permute.xlu0 %366
      %368 = vset.pattern.permute.xlu0 0
      %369 = vperm.xlu0 %368, %v310
      %v370 = vpop.permute.xlu0 %369
      %371 = vset.pattern.permute.xlu0 0
      %372 = vperm.xlu0 %371, %v311
      %v373 = vpop.permute.xlu0 %372
      %374 = vset.pattern.permute.xlu0 0
      %375 = vperm.xlu0 %374, %v312
      %v376 = vpop.permute.xlu0 %375
      %377 = vset.pattern.permute.xlu0 0
      %378 = vperm.xlu0 %377, %v313
      %v379 = vpop.permute.xlu0 %378
      %380 = vset.pattern.permute.xlu0 0
      %381 = vperm.xlu0 %380, %v314
      %v382 = vpop.permute.xlu0 %381
      %383 = vset.pattern.permute.xlu0 0
      %384 = vperm.xlu0 %383, %v315
      %v385 = vpop.permute.xlu0 %384
      %386 = vset.pattern.permute.xlu0 0
      %387 = vperm.xlu0 %386, %v316
      %v388 = vpop.permute.xlu0 %387
      %389 = vset.pattern.permute.xlu0 0
      %390 = vperm.xlu0 %389, %v317
      %v391 = vpop.permute.xlu0 %390
      %392 = vset.pattern.permute.xlu0 0
      %393 = vperm.xlu0 %392, %v318
      %v394 = vpop.permute.xlu0 %393
      %395 = vset.pattern.permute.xlu0 0
      %396 = vperm.xlu0 %395, %v319
      %v397 = vpop.permute.xlu0 %396
      %398 = vset.pattern.permute.xlu0 0
      %399 = vperm.xlu0 %398, %v320
      %v400 = vpop.permute.xlu0 %399
      %401 = vset.pattern.permute.xlu0 0
      %402 = vperm.xlu0 %401, %v321
      %v403 = vpop.permute.xlu0 %402
      %404 = vset.pattern.permute.xlu0 0
      %405 = vperm.xlu0 %404, %v322
      %v406 = vpop.permute.xlu0 %405
      %407 = vset.pattern.permute.xlu0 0
      %408 = vperm.xlu0 %407, %v323
      %v409 = vpop.permute.xlu0 %408
      %410 = vset.pattern.permute.xlu0 0
      %411 = vperm.xlu0 %410, %v324
      %v412 = vpop.permute.xlu0 %411
      %413 = vset.pattern.permute.xlu0 0
      %414 = vperm.xlu0 %413, %v325
      %v415 = vpop.permute.xlu0 %414
      %416 = vset.pattern.permute.xlu0 0
      %417 = vperm.xlu0 %416, %v326
      %v418 = vpop.permute.xlu0 %417
      %419 = vset.pattern.permute.xlu0 0
      %420 = vperm.xlu0 %419, %v327
      %v421 = vpop.permute.xlu0 %420
      %422 = vset.pattern.permute.xlu0 0
      %423 = vperm.xlu0 %422, %v328
      %v424 = vpop.permute.xlu0 %423
      %vm425 = vcmp.eq.s32.totalorder %v331, 1
      %vm426 = vcmp.eq.s32.totalorder %v334, 1
      %vm427 = vcmp.eq.s32.totalorder %v337, 1
      %vm428 = vcmp.eq.s32.totalorder %v340, 1
      %vm429 = vcmp.eq.s32.totalorder %v343, 1
      %vm430 = vcmp.eq.s32.totalorder %v346, 1
      %vm431 = vcmp.eq.s32.totalorder %v349, 1
      %vm432 = vcmp.eq.s32.totalorder %v352, 1
      %vm433 = vcmp.eq.s32.totalorder %v355, 1
      %vm434 = vcmp.eq.s32.totalorder %v358, 1
      %vm435 = vcmp.eq.s32.totalorder %v361, 1
      %vm436 = vcmp.eq.s32.totalorder %v364, 1
      %vm437 = vcmp.eq.s32.totalorder %v367, 1
      %vm438 = vcmp.eq.s32.totalorder %v370, 1
      %vm439 = vcmp.eq.s32.totalorder %v373, 1
      %vm440 = vcmp.eq.s32.totalorder %v376, 1
      %vm441 = vcmp.eq.s32.totalorder %v379, 1
      %vm442 = vcmp.eq.s32.totalorder %v382, 1
      %vm443 = vcmp.eq.s32.totalorder %v385, 1
      %vm444 = vcmp.eq.s32.totalorder %v388, 1
      %vm445 = vcmp.eq.s32.totalorder %v391, 1
      %vm446 = vcmp.eq.s32.totalorder %v394, 1
      %vm447 = vcmp.eq.s32.totalorder %v397, 1
      %vm448 = vcmp.eq.s32.totalorder %v400, 1
      %vm449 = vcmp.eq.s32.totalorder %v403, 1
      %vm450 = vcmp.eq.s32.totalorder %v406, 1
      %vm451 = vcmp.eq.s32.totalorder %v409, 1
      %vm452 = vcmp.eq.s32.totalorder %v412, 1
      %vm453 = vcmp.eq.s32.totalorder %v415, 1
      %vm454 = vcmp.eq.s32.totalorder %v418, 1
      %vm455 = vcmp.eq.s32.totalorder %v421, 1
      %vm456 = vcmp.eq.s32.totalorder %v424, 1
      %v457 = vsel %vm425, %v182, -inf
      %v458 = vsel %vm426, %v183, -inf
      %v459 = vsel %vm427, %v184, -inf
      %v460 = vsel %vm428, %v185, -inf
      %v461 = vsel %vm429, %v186, -inf
      %v462 = vsel %vm430, %v187, -inf
      %v463 = vsel %vm431, %v188, -inf
      %v464 = vsel %vm432, %v189, -inf
      %v465 = vsel %vm433, %v190, -inf
      %v466 = vsel %vm434, %v191, -inf
      %v467 = vsel %vm435, %v192, -inf
      %v468 = vsel %vm436, %v193, -inf
      %v469 = vsel %vm437, %v194, -inf
      %v470 = vsel %vm438, %v195, -inf
      %v471 = vsel %vm439, %v196, -inf
      %v472 = vsel %vm440, %v197, -inf
      %v473 = vsel %vm441, %v198, -inf
      %v474 = vsel %vm442, %v199, -inf
      %v475 = vsel %vm443, %v200, -inf
      %v476 = vsel %vm444, %v201, -inf
      %v477 = vsel %vm445, %v202, -inf
      %v478 = vsel %vm446, %v203, -inf
      %v479 = vsel %vm447, %v204, -inf
      %v480 = vsel %vm448, %v205, -inf
      %v481 = vsel %vm449, %v206, -inf
      %v482 = vsel %vm450, %v207, -inf
      %v483 = vsel %vm451, %v208, -inf
      %v484 = vsel %vm452, %v209, -inf
      %v485 = vsel %vm453, %v210, -inf
      %v486 = vsel %vm454, %v211, -inf
      %v487 = vsel %vm455, %v212, -inf
      %v488 = vsel %vm456, %v213, -inf
      %v489 = vmax.f32 %v457, %v461
      %v490 = vmax.f32 %v458, %v462
      %v491 = vmax.f32 %v459, %v463
      %v492 = vmax.f32 %v460, %v464
      %v493 = vmax.f32 %v489, %v465
      %v494 = vmax.f32 %v490, %v466
      %v495 = vmax.f32 %v491, %v467
      %v496 = vmax.f32 %v492, %v468
      %v497 = vmax.f32 %v493, %v469
      %v498 = vmax.f32 %v494, %v470
      %v499 = vmax.f32 %v495, %v471
      %v500 = vmax.f32 %v496, %v472
      %v501 = vmax.f32 %v497, %v473
      %v502 = vmax.f32 %v498, %v474
      %v503 = vmax.f32 %v499, %v475
      %v504 = vmax.f32 %v500, %v476
      %v505 = vmax.f32 %v501, %v477
      %v506 = vmax.f32 %v502, %v478
      %v507 = vmax.f32 %v503, %v479
      %v508 = vmax.f32 %v504, %v480
      %v509 = vmax.f32 %v505, %v481
      %v510 = vmax.f32 %v506, %v482
      %v511 = vmax.f32 %v507, %v483
      %v512 = vmax.f32 %v508, %v484
      %v513 = vmax.f32 %v509, %v485
      %v514 = vmax.f32 %v510, %v486
      %v515 = vmax.f32 %v511, %v487
      %v516 = vmax.f32 %v512, %v488
      %v517 = vmax.f32 %v513, %v514
      %v518 = vmax.f32 %v515, %v516
      %v519 = vmax.f32 %v517, %v518
      %v520 = vrot.slane %v519, 4
      %v521 = vmax.f32 %v519, %v520
      %v522 = vrot.slane %v521, 2
      %v523 = vmax.f32 %v521, %v522
      %v524 = vrot.slane %v523, 1
      %v525 = vmax.f32 %v523, %v524
      %s526 = scalar_lea.vmem [#allocation2], %s258
      %v527 = vld [vmem:[%s526] sm:$0x1]
      %v528 = vmax.f32 %v527, %v525
      %529 = vst [vmem:[%s526] sm:$0x1] %v528
    $region26: #{_graph_pool_padded.1} parent=20 // loop_footer
      %s260 = sadd.s32 %s258, 1
    $region27: #{_graph_pool_padded.1} parent=20 // loop_footer_branch
      %257 = sbr.rel target = $region23
    $region28: #{_graph_pool_padded.1} parent=20 // loop_exit
      _
  $region21: #{_graph_pool_padded.1} parent=0 // pred_fallthru
    _
  // Predicated region
  $region29: #{_graph_pool_padded.1} parent=0 // pred_check
    %p530 = pneg %p156
  $region30: #{_graph_pool_padded.1} parent=0 // pred_check_branch
    %532 = sbr.rel (%p530) target = $region32
  $region31: #{_graph_pool_padded.1} parent=0 // pred_region
    %v533 = vld [vmem:[%s6] sm:$0xff]
    %v534 = vld [vmem:[%s6 + $0x8] sm:$0xff]
    %v535 = vld [vmem:[%s6 + $0x10] sm:$0xff]
    %v536 = vld [vmem:[%s6 + $0x18] sm:$0xff]
    %v537 = vld [vmem:[%s6 + $0x20] sm:$0xff]
    %v538 = vld [vmem:[%s6 + $0x28] sm:$0xff]
    %v539 = vld [vmem:[%s6 + $0x30] sm:$0xff]
    %v540 = vld [vmem:[%s6 + $0x38] sm:$0xff]
    %v541 = vld [vmem:[%s6 + $0x40] sm:$0xff]
    %v542 = vld [vmem:[%s6 + $0x48] sm:$0xff]
    %v543 = vld [vmem:[%s6 + $0x50] sm:$0xff]
    %v544 = vld [vmem:[%s6 + $0x58] sm:$0xff]
    %v545 = vld [vmem:[%s6 + $0x60] sm:$0xff]
    %v546 = vld [vmem:[%s6 + $0x68] sm:$0xff]
    %v547 = vld [vmem:[%s6 + $0x70] sm:$0xff]
    %v548 = vld [vmem:[%s6 + $0x78] sm:$0xff]
    %v549 = vld [vmem:[#allocation2] sm:$0xff]
    %v550 = vld [vmem:[#allocation2 + $0x8] sm:$0xff]
    %v551 = vld [vmem:[#allocation2 + $0x10] sm:$0xff]
    %v552 = vld [vmem:[#allocation2 + $0x18] sm:$0xff]
    %v553 = vld [vmem:[#allocation2 + $0x20] sm:$0xff]
    %v554 = vld [vmem:[#allocation2 + $0x28] sm:$0xff]
    %v555 = vld [vmem:[#allocation2 + $0x30] sm:$0xff]
    %v556 = vld [vmem:[#allocation2 + $0x38] sm:$0xff]
    %v557 = vld [vmem:[#allocation2 + $0x40] sm:$0xff]
    %v558 = vld [vmem:[#allocation2 + $0x48] sm:$0xff]
    %v559 = vld [vmem:[#allocation2 + $0x50] sm:$0xff]
    %v560 = vld [vmem:[#allocation2 + $0x58] sm:$0xff]
    %v561 = vld [vmem:[#allocation2 + $0x60] sm:$0xff]
    %v562 = vld [vmem:[#allocation2 + $0x68] sm:$0xff]
    %v563 = vld [vmem:[#allocation2 + $0x70] sm:$0xff]
    %v564 = vld [vmem:[#allocation2 + $0x78] sm:$0xff]
    %vm565 = vcmp.gt.f32.partialorder %v533, 0.0
    %vm566 = vcmp.gt.f32.partialorder %v534, 0.0
    %vm567 = vcmp.gt.f32.partialorder %v535, 0.0
    %vm568 = vcmp.gt.f32.partialorder %v536, 0.0
    %vm569 = vcmp.gt.f32.partialorder %v537, 0.0
    %vm570 = vcmp.gt.f32.partialorder %v538, 0.0
    %vm571 = vcmp.gt.f32.partialorder %v539, 0.0
    %vm572 = vcmp.gt.f32.partialorder %v540, 0.0
    %vm573 = vcmp.gt.f32.partialorder %v541, 0.0
    %vm574 = vcmp.gt.f32.partialorder %v542, 0.0
    %vm575 = vcmp.gt.f32.partialorder %v543, 0.0
    %vm576 = vcmp.gt.f32.partialorder %v544, 0.0
    %vm577 = vcmp.gt.f32.partialorder %v545, 0.0
    %vm578 = vcmp.gt.f32.partialorder %v546, 0.0
    %vm579 = vcmp.gt.f32.partialorder %v547, 0.0
    %vm580 = vcmp.gt.f32.partialorder %v548, 0.0
    %v581 = vsel %vm565, 1, 0
    %v582 = vsel %vm566, 1, 0
    %v583 = vsel %vm567, 1, 0
    %v584 = vsel %vm568, 1, 0
    %v585 = vsel %vm569, 1, 0
    %v586 = vsel %vm570, 1, 0
    %v587 = vsel %vm571, 1, 0
    %v588 = vsel %vm572, 1, 0
    %v589 = vsel %vm573, 1, 0
    %v590 = vsel %vm574, 1, 0
    %v591 = vsel %vm575, 1, 0
    %v592 = vsel %vm576, 1, 0
    %v593 = vsel %vm577, 1, 0
    %v594 = vsel %vm578, 1, 0
    %v595 = vsel %vm579, 1, 0
    %v596 = vsel %vm580, 1, 0
    %597 = vset.pattern.permute.xlu0 0
    %598 = vperm.xlu0 %597, %v581
    %v599 = vpop.permute.xlu0 %598
    %600 = vset.pattern.permute.xlu0 0
    %601 = vperm.xlu0 %600, %v582
    %v602 = vpop.permute.xlu0 %601
    %603 = vset.pattern.permute.xlu0 0
    %604 = vperm.xlu0 %603, %v583
    %v605 = vpop.permute.xlu0 %604
    %606 = vset.pattern.permute.xlu0 0
    %607 = vperm.xlu0 %606, %v584
    %v608 = vpop.permute.xlu0 %607
    %609 = vset.pattern.permute.xlu0 0
    %610 = vperm.xlu0 %609, %v585
    %v611 = vpop.permute.xlu0 %610
    %612 = vset.pattern.permute.xlu0 0
    %613 = vperm.xlu0 %612, %v586
    %v614 = vpop.permute.xlu0 %613
    %615 = vset.pattern.permute.xlu0 0
    %616 = vperm.xlu0 %615, %v587
    %v617 = vpop.permute.xlu0 %616
    %618 = vset.pattern.permute.xlu0 0
    %619 = vperm.xlu0 %618, %v588
    %v620 = vpop.permute.xlu0 %619
    %621 = vset.pattern.permute.xlu0 0
    %622 = vperm.xlu0 %621, %v589
    %v623 = vpop.permute.xlu0 %622
    %624 = vset.pattern.permute.xlu0 0
    %625 = vperm.xlu0 %624, %v590
    %v626 = vpop.permute.xlu0 %625
    %627 = vset.pattern.permute.xlu0 0
    %628 = vperm.xlu0 %627, %v591
    %v629 = vpop.permute.xlu0 %628
    %630 = vset.pattern.permute.xlu0 0
    %631 = vperm.xlu0 %630, %v592
    %v632 = vpop.permute.xlu0 %631
    %633 = vset.pattern.permute.xlu0 0
    %634 = vperm.xlu0 %633, %v593
    %v635 = vpop.permute.xlu0 %634
    %636 = vset.pattern.permute.xlu0 0
    %637 = vperm.xlu0 %636, %v594
    %v638 = vpop.permute.xlu0 %637
    %639 = vset.pattern.permute.xlu0 0
    %640 = vperm.xlu0 %639, %v595
    %v641 = vpop.permute.xlu0 %640
    %642 = vset.pattern.permute.xlu0 0
    %643 = vperm.xlu0 %642, %v596
    %v644 = vpop.permute.xlu0 %643
    %vm645 = vcmp.eq.s32.totalorder %v599, 1
    %vm646 = vcmp.eq.s32.totalorder %v602, 1
    %vm647 = vcmp.eq.s32.totalorder %v605, 1
    %vm648 = vcmp.eq.s32.totalorder %v608, 1
    %vm649 = vcmp.eq.s32.totalorder %v611, 1
    %vm650 = vcmp.eq.s32.totalorder %v614, 1
    %vm651 = vcmp.eq.s32.totalorder %v617, 1
    %vm652 = vcmp.eq.s32.totalorder %v620, 1
    %vm653 = vcmp.eq.s32.totalorder %v623, 1
    %vm654 = vcmp.eq.s32.totalorder %v626, 1
    %vm655 = vcmp.eq.s32.totalorder %v629, 1
    %vm656 = vcmp.eq.s32.totalorder %v632, 1
    %vm657 = vcmp.eq.s32.totalorder %v635, 1
    %vm658 = vcmp.eq.s32.totalorder %v638, 1
    %vm659 = vcmp.eq.s32.totalorder %v641, 1
    %vm660 = vcmp.eq.s32.totalorder %v644, 1
    %v661 = vsel %vm645, %v549, 0.0
    %v662 = vsel %vm646, %v550, 0.0
    %v663 = vsel %vm647, %v551, 0.0
    %v664 = vsel %vm648, %v552, 0.0
    %v665 = vsel %vm649, %v553, 0.0
    %v666 = vsel %vm650, %v554, 0.0
    %v667 = vsel %vm651, %v555, 0.0
    %v668 = vsel %vm652, %v556, 0.0
    %v669 = vsel %vm653, %v557, 0.0
    %v670 = vsel %vm654, %v558, 0.0
    %v671 = vsel %vm655, %v559, 0.0
    %v672 = vsel %vm656, %v560, 0.0
    %v673 = vsel %vm657, %v561, 0.0
    %v674 = vsel %vm658, %v562, 0.0
    %v675 = vsel %vm659, %v563, 0.0
    %v676 = vsel %vm660, %v564, 0.0
    %677 = vst [vmem:[%s7] sm:$0xff] %v661
    %678 = vst [vmem:[%s7 + $0x8] sm:$0xff] %v662
    %679 = vst [vmem:[%s7 + $0x10] sm:$0xff] %v663
    %680 = vst [vmem:[%s7 + $0x18] sm:$0xff] %v664
    %681 = vst [vmem:[%s7 + $0x20] sm:$0xff] %v665
    %682 = vst [vmem:[%s7 + $0x28] sm:$0xff] %v666
    %683 = vst [vmem:[%s7 + $0x30] sm:$0xff] %v667
    %684 = vst [vmem:[%s7 + $0x38] sm:$0xff] %v668
    %685 = vst [vmem:[%s7 + $0x40] sm:$0xff] %v669
    %686 = vst [vmem:[%s7 + $0x48] sm:$0xff] %v670
    %687 = vst [vmem:[%s7 + $0x50] sm:$0xff] %v671
    %688 = vst [vmem:[%s7 + $0x58] sm:$0xff] %v672
    %689 = vst [vmem:[%s7 + $0x60] sm:$0xff] %v673
    %690 = vst [vmem:[%s7 + $0x68] sm:$0xff] %v674
    %691 = vst [vmem:[%s7 + $0x70] sm:$0xff] %v675
    %692 = vst [vmem:[%s7 + $0x78] sm:$0xff] %v676
  $region32: #{_graph_pool_padded.1} parent=0 // pred_fallthru
    _
  // Predicated region
  $region33: #{_graph_pool_padded.1} parent=0 // pred_check
    _
  $region34: #{_graph_pool_padded.1} parent=0 // pred_check_branch
    %694 = sbr.rel (0) target = $region36
  $region35: #{_graph_pool_padded.1} parent=0 // pred_region
    _
  $region36: #{_graph_pool_padded.1} parent=0 // pred_fallthru
    _
  // Predicated region
  $region37: #{_graph_pool_padded.1} parent=0 // pred_check
    _
  $region38: #{_graph_pool_padded.1} parent=0 // pred_check_branch
    %696 = sbr.rel (0) target = $region40
  $region39: #{_graph_pool_padded.1} parent=0 // pred_region
    _
  $region40: #{_graph_pool_padded.1} parent=0 // pred_fallthru
    _

</llo_original>
